<compile_context>
chip_gen: v6e
topology: v6e:2x2x1
jax: 0.10.0
libtpu: 0.0.40
codegen_flags: <defaults>
</compile_context>

<pallas_src>
import math
from functools import partial

import jax
import jax.numpy as jnp
from jax.experimental import pallas as pl
from jax.experimental.pallas import tpu as pltpu


# ----------------------------------------------------------------------------- kernel
def _edge_apply_kernel(ef_ref, nb_ef_ref, src_nf_ref, dst_nf_ref,
                       w1_ref, w2_ref, bias_ref, out_ref, *, use_relu, mxu_dtype):
    # Elementwise prep on the VPU (the 0.5 for srcdst is folded into W2 on host).
    tmp_ef = ef_ref[...] + nb_ef_ref[...]            # [TR, lanes]
    srcdst_nf = src_nf_ref[...] + dst_nf_ref[...]    # [TR, lanes]

    if mxu_dtype is not None:                        # optional (v5e MXU relief)
        tmp_ef = tmp_ef.astype(mxu_dtype)
        srcdst_nf = srcdst_nf.astype(mxu_dtype)

    # Split linear layer: two MXU dots with f32 accumulation, no concatenate.
    y = jnp.dot(tmp_ef, w1_ref[...], preferred_element_type=jnp.float32)
    y = y + jnp.dot(srcdst_nf, w2_ref[...], preferred_element_type=jnp.float32)

    # Fused (dense_bias + extra bias); bias_ref is a full (8, lanes) tile with
    # identical rows, read one row and broadcast along sublanes.
    y = y + bias_ref[0:1, :]

    if use_relu:
        y = jnp.maximum(y, 0.0)

    # NOTE: rows are independent; the masked ragged tail relies on this.
    out_ref[...] = y.astype(out_ref.dtype)


# ----------------------------------------------------------------------------- helpers
def _pick_group_factor(F, max_lanes=512):
    """Lane-packing factor R: smallest R with (R*F) % 128 == 0 (full lane width),
    capped at R*F <= max_lanes; otherwise best fill of one 128-lane vreg."""
    if F % 128 == 0:
        return 1
    if F > max_lanes:
        return 1
    r_align = 128 // math.gcd(F, 128)          # minimal R making R*F a 128-multiple
    if r_align * F <= max_lanes:
        return r_align
    return max(1, 128 // F)


def _choose_tile_rows(rows, lanes, itemsize, target_block_bytes, vmem_cap_bytes):
    """Rows per grid step (multiple of 8 unless a single full block)."""
    if rows <= 8:
        return rows
    # Target 1-4 MiB streamed per array per step so the ~0.35 us/step pipeline
    # overhead stays small (v6e measured 63%->86% of HBM roofline going to
    # >=1 MiB blocks; matters even more at v7x's 3.2 TB/s).
    tr = max(8, target_block_bytes // (lanes * itemsize))
    # VMEM budget: 4 inputs + 1 output, double buffered, plus ~3 f32 in-kernel
    # temporaries (tmp_ef, srcdst_nf, y).  Keeps the tile inside v7x's 64 MiB
    # physical VMEM (and the explicit scoped limit we set) with headroom.
    per_row_bytes = lanes * (5 * 2 * itemsize + 3 * 4)
    tr = min(tr, max(8, vmem_cap_bytes // per_row_bytes))
    # Guarantee >= 2 grid steps so dimension_semantics=("parallel",) can shard
    # rows across both v7x TensorCores.
    half = (((rows + 1) // 2) + 7) // 8 * 8
    if half < rows:
        tr = min(tr, half)
    tr = max(8, (tr // 8) * 8)
    return rows if tr >= rows else tr


def prepare_edge_apply_params(w_t, dense_bias, bias, *, group_factor=1, mxu_dtype=None):
    """Host-side parameter prep (call once and reuse across steps).

    w_t:        [2F, F] transposed nn.Linear weight (x @ w_t == linear(x)).
    dense_bias: [F] nn.Linear bias.
    bias:       [F] extra bias (self.bias) or None.
    """
    F = w_t.shape[1]
    assert w_t.shape == (2 * F, F)
    R = int(group_factor)
    w1 = w_t[:F, :]                         # applied to (ef + nb_ef)
    w2 = w_t[F:, :] * 0.5                   # fold the /2 into the weight
    if R > 1:
        eye_r = jnp.eye(R, dtype=w_t.dtype)
        w1 = jnp.kron(eye_r, w1)            # [R*F, R*F] block-diagonal (resident)
        w2 = jnp.kron(eye_r, w2)
    if mxu_dtype is not None:
        w1 = w1.astype(mxu_dtype)
        w2 = w2.astype(mxu_dtype)
    b = dense_bias if bias is None else dense_bias + bias
    bias8 = jnp.tile(b.reshape(1, F), (8, R))   # full (8, lanes) sublane tile
    return {"w1": w1, "w2": w2, "bias8": bias8,
            "group_factor": R, "mxu_dtype": mxu_dtype}


# ----------------------------------------------------------------------------- pallas_call wrapper
def _edge_apply_call(ef_g, nb_g, src_g, dst_g, w1, w2, bias8, *, use_relu, mxu_dtype,
                     target_block_bytes, vmem_cap_bytes, vmem_limit_bytes):
    rows, lanes = ef_g.shape
    itemsize = ef_g.dtype.itemsize
    tile_rows = _choose_tile_rows(rows, lanes, itemsize,
                                  target_block_bytes, vmem_cap_bytes)
    grid = (pl.cdiv(rows, tile_rows),)       # ragged tail masked by Pallas

    if vmem_limit_bytes is None:
        # Budget = streamed blocks (double buffered) + in-kernel f32 temporaries
        # + resident weights/bias.  Never set below 32 MiB (safe on all chips),
        # never above 60 MiB (stays under v7x's 64 MiB physical VMEM).
        stream = 5 * 2 * tile_rows * lanes * itemsize
        temps = 3 * tile_rows * lanes * 4
        weights = 2 * 2 * w1.size * w1.dtype.itemsize + 2 * bias8.size * bias8.dtype.itemsize
        est = stream + temps + weights
        vmem_limit_bytes = min(max(int(est * 1.25) + (1 << 20), 32 << 20), 60 << 20)

    feat_spec = pl.BlockSpec((tile_rows, lanes), lambda i: (i, 0))
    kernel = partial(_edge_apply_kernel, use_relu=use_relu, mxu_dtype=mxu_dtype)

    # NOTE: the resident W1/W2/bias operands could use
    # pipeline_mode=pl.Buffered(1) to reclaim their spare buffer (~130 KB), and
    # the 4 feature streams could be swept at pl.Buffered(3); both are left at
    # defaults for portability — the VMEM budget above already accounts for 2x.
    return pl.pallas_call(
        kernel,
        out_shape=jax.ShapeDtypeStruct((rows, lanes), ef_g.dtype),
        grid_spec=pltpu.PrefetchScalarGridSpec(
            num_scalar_prefetch=0,
            grid=grid,
            in_specs=[
                feat_spec,                                    # ef
                feat_spec,                                    # dst nb_ef
                feat_spec,                                    # src nf
                feat_spec,                                    # dst nf
                pl.BlockSpec(w1.shape, lambda i: (0, 0)),     # W1 (resident)
                pl.BlockSpec(w2.shape, lambda i: (0, 0)),     # W2 (resident)
                pl.BlockSpec(bias8.shape, lambda i: (0, 0)),  # fused bias tile
            ],
            out_specs=feat_spec,
        ),
        compiler_params=pltpu.CompilerParams(
            dimension_semantics=("parallel",),
            vmem_limit_bytes=vmem_limit_bytes),
    )(ef_g, nb_g, src_g, dst_g, w1, w2, bias8)


def edge_apply_forward(ef, nb_ef, src_nf, dst_nf, w_t, dense_bias, bias,
                       *, activation=None, params=None,
                       target_block_bytes=2 << 20, vmem_cap_bytes=30 << 20,
                       mxu_dtype=None, vmem_limit_bytes=None):
    """Pallas implementation of EdgeApplyModule.forward.

    Args:
      ef, nb_ef, src_nf, dst_nf: [E, F] per-edge feature tensors.
      w_t:        [2F, F] transposed nn.Linear weight.
      dense_bias: [F] nn.Linear bias.
      bias:       [F] extra bias parameter (self.bias) or None.
      activation: None or "relu".
      params:     optional output of prepare_edge_apply_params (hoist the
                  kron/tile prep out of the step loop).
      target_block_bytes: streamed bytes per array per grid step (1-4 MiB;
                  ~1 MiB already saturates v5e, 2-4 MiB recommended on v7x).
      vmem_cap_bytes: cap on the per-step VMEM working set used when picking
                  the tile (keep <= ~30 MiB so v7x's 64 MiB physical is safe).
      mxu_dtype:  e.g. jnp.bfloat16 to relieve MXU pressure from the f32
                  block-diagonal dots (useful on v5e when R >= 4); default
                  None keeps exact f32 numerics.
      vmem_limit_bytes: optional explicit scoped-VMEM override.
    """
    E, F = ef.shape
    assert w_t.shape == (2 * F, F)
    if activation not in (None, "relu"):
        raise ValueError(f"unsupported activation: {activation!r}")
    use_relu = activation == "relu"

    if params is None:
        R = _pick_group_factor(F)
        params = prepare_edge_apply_params(w_t, dense_bias, bias,
                                           group_factor=R, mxu_dtype=mxu_dtype)
    R = params["group_factor"]

    call = partial(_edge_apply_call, use_relu=use_relu,
                   mxu_dtype=params["mxu_dtype"],
                   target_block_bytes=target_block_bytes,
                   vmem_cap_bytes=vmem_cap_bytes,
                   vmem_limit_bytes=vmem_limit_bytes)

    main = (E // R) * R
    outs = []
    if main > 0:
        rows, lanes = main // R, R * F
        ef_m = ef if main == E else ef[:main]
        nb_m = nb_ef if main == E else nb_ef[:main]
        src_m = src_nf if main == E else src_nf[:main]
        dst_m = dst_nf if main == E else dst_nf[:main]
        # Row-major reshapes of contiguous arrays are free (bitcast).
        out_main = call(ef_m.reshape(rows, lanes), nb_m.reshape(rows, lanes),
                        src_m.reshape(rows, lanes), dst_m.reshape(rows, lanes),
                        params["w1"], params["w2"], params["bias8"])
        outs.append(out_main.reshape(main, F))
    if main < E:
        # < R leftover edges: tiny ungrouped call (noise).  For production, pad
        # E to a multiple of R at graph-construction time so this path (and the
        # input slices above) disappears entirely.
        rem_params = prepare_edge_apply_params(w_t, dense_bias, bias,
                                               group_factor=1,
                                               mxu_dtype=params["mxu_dtype"])
        out_rem = call(ef[main:], nb_ef[main:], src_nf[main:], dst_nf[main:],
                       rem_params["w1"], rem_params["w2"], rem_params["bias8"])
        outs.append(out_rem)

    return outs[0] if len(outs) == 1 else jnp.concatenate(outs, axis=0)


# ----------------------------------------------------------------------------- reference & demo
def _reference(ef, nb_ef, src_nf, dst_nf, w_t, dense_bias, bias, activation):
    tmp_ef = ef + nb_ef
    srcdst_nf = (src_nf + dst_nf) / 2.0
    x = jnp.concatenate([tmp_ef, srcdst_nf], axis=1)
    y = x @ w_t + dense_bias + bias
    if activation == "relu":
        y = jnp.maximum(y, 0.0)
    return y


if __name__ == "__main__":
    def make_case(key, E, F):
        ks = jax.random.split(key, 7)
        ef = jax.random.normal(ks[0], (E, F), jnp.float32)
        nb_ef = jax.random.normal(ks[1], (E, F), jnp.float32)
        src_nf = jax.random.normal(ks[2], (E, F), jnp.float32)
        dst_nf = jax.random.normal(ks[3], (E, F), jnp.float32)
        # Parameters (shapes as in EdgeApplyModule.__init__):
        #   self.bias [F] ~ U(-1/sqrt(F), 1/sqrt(F)); my_dense.weight [F, 2F].
        stdv = 1.0 / math.sqrt(F)
        bias = jax.random.uniform(ks[4], (F,), jnp.float32, -stdv, stdv)
        lb = 1.0 / math.sqrt(2 * F)
        w = jax.random.uniform(ks[5], (F, 2 * F), jnp.float32, -lb, lb)
        dense_bias = jax.random.uniform(ks[6], (F,), jnp.float32, -lb, lb)
        return ef, nb_ef, src_nf, dst_nf, w.T, dense_bias, bias

    key = jax.random.PRNGKey(0)
    k1, k2 = jax.random.split(key)

    # Case 1: F=32 -> R=4 lane packing (lanes=128), rows=125 -> 2 grid steps.
    args1 = make_case(k1, 500, 32)
    out1 = jax.block_until_ready(edge_apply_forward(*args1, activation="relu"))
    ref1 = _reference(*args1, "relu")
    assert out1.shape == (500, 32)
    assert jnp.allclose(out1, ref1, atol=2e-5, rtol=2e-5), "case 1 mismatch"

    # Case 2: F=48 (128 % F != 0 -> R=8 via lcm, lanes=384), E % R != 0 -> tiny
    # ungrouped remainder call.
    args2 = make_case(k2, 53, 48)
    out2 = jax.block_until_ready(edge_apply_forward(*args2, activation="relu"))
    ref2 = _reference(*args2, "relu")
    assert out2.shape == (53, 48)
    assert jnp.allclose(out2, ref2, atol=2e-5, rtol=2e-5), "case 2 mismatch"

    print("KERNEL_OK")
</pallas_src>

<mosaic_0001>
module attributes {stable_mosaic.version = 11 : i64} {
  func.func @_edge_apply_kernel(%arg0: i32, %arg1: memref<64x128xf32, #tpu.memory_space<vmem>>, %arg2: memref<64x128xf32, #tpu.memory_space<vmem>>, %arg3: memref<64x128xf32, #tpu.memory_space<vmem>>, %arg4: memref<64x128xf32, #tpu.memory_space<vmem>>, %arg5: memref<128x128xf32, #tpu.memory_space<vmem>>, %arg6: memref<128x128xf32, #tpu.memory_space<vmem>>, %arg7: memref<8x128xf32, #tpu.memory_space<vmem>>, %arg8: memref<64x128xf32, #tpu.memory_space<vmem>>) attributes {dimension_semantics = [#tpu.dimension_semantics<parallel>], iteration_bounds = array<i64: 2>, scalar_prefetch = 0 : i64, scratch_operands = 0 : i64, tpu.core_type = #tpu.core_type<tc>, window_params = [{transform_indices = @transform_0, window_bounds = array<i64: 64, 128>}, {transform_indices = @transform_1, window_bounds = array<i64: 64, 128>}, {transform_indices = @transform_2, window_bounds = array<i64: 64, 128>}, {transform_indices = @transform_3, window_bounds = array<i64: 64, 128>}, {pipeline_mode = #tpu.pipeline_mode<synchronous>, transform_indices = @transform_4, window_bounds = array<i64: 128, 128>}, {pipeline_mode = #tpu.pipeline_mode<synchronous>, transform_indices = @transform_5, window_bounds = array<i64: 128, 128>}, {pipeline_mode = #tpu.pipeline_mode<synchronous>, transform_indices = @transform_6, window_bounds = array<i64: 8, 128>}, {transform_indices = @transform_7, window_bounds = array<i64: 64, 128>}]} {
    %c0 = arith.constant 0 : index
    %c0_0 = arith.constant 0 : index
    %0 = vector.load %arg1[%c0, %c0_0] : memref<64x128xf32, #tpu.memory_space<vmem>>, vector<64x128xf32>
    %c0_1 = arith.constant 0 : index
    %c0_2 = arith.constant 0 : index
    %1 = vector.load %arg2[%c0_1, %c0_2] : memref<64x128xf32, #tpu.memory_space<vmem>>, vector<64x128xf32>
    %2 = arith.addf %0, %1 : vector<64x128xf32>
    %c0_3 = arith.constant 0 : index
    %c0_4 = arith.constant 0 : index
    %3 = vector.load %arg3[%c0_3, %c0_4] : memref<64x128xf32, #tpu.memory_space<vmem>>, vector<64x128xf32>
    %c0_5 = arith.constant 0 : index
    %c0_6 = arith.constant 0 : index
    %4 = vector.load %arg4[%c0_5, %c0_6] : memref<64x128xf32, #tpu.memory_space<vmem>>, vector<64x128xf32>
    %5 = arith.addf %3, %4 : vector<64x128xf32>
    %c0_7 = arith.constant 0 : index
    %c0_8 = arith.constant 0 : index
    %6 = vector.load %arg5[%c0_7, %c0_8] : memref<128x128xf32, #tpu.memory_space<vmem>>, vector<128x128xf32>
    %cst = arith.constant dense<0.000000e+00> : vector<64x128xf32>
    %7 = tpu.matmul %2, %6, %cst {dimension_numbers = #tpu.dot_dimension_numbers<[1], [0], [0], [1], [0, 0, 1, 1], [], []>} : vector<64x128xf32>, vector<128x128xf32>, vector<64x128xf32> -> vector<64x128xf32>
    %c0_9 = arith.constant 0 : index
    %c0_10 = arith.constant 0 : index
    %8 = vector.load %arg6[%c0_9, %c0_10] : memref<128x128xf32, #tpu.memory_space<vmem>>, vector<128x128xf32>
    %cst_11 = arith.constant dense<0.000000e+00> : vector<64x128xf32>
    %9 = tpu.matmul %5, %8, %cst_11 {dimension_numbers = #tpu.dot_dimension_numbers<[1], [0], [0], [1], [0, 0, 1, 1], [], []>} : vector<64x128xf32>, vector<128x128xf32>, vector<64x128xf32> -> vector<64x128xf32>
    %10 = arith.addf %7, %9 : vector<64x128xf32>
    %c0_12 = arith.constant 0 : index
    %c0_13 = arith.constant 0 : index
    %11 = vector.load %arg7[%c0_12, %c0_13] : memref<8x128xf32, #tpu.memory_space<vmem>>, vector<1x128xf32>
    %12 = vector.broadcast %11 : vector<1x128xf32> to vector<64x128xf32>
    %13 = arith.addf %10, %12 : vector<64x128xf32>
    %cst_14 = arith.constant 0.000000e+00 : f32
    %14 = vector.broadcast %cst_14 : f32 to vector<64x128xf32>
    %15 = arith.maximumf %13, %14 : vector<64x128xf32>
    %c0_15 = arith.constant 0 : index
    %c0_16 = arith.constant 0 : index
    %16 = vector.load %arg8[%c0_15, %c0_16] : memref<64x128xf32, #tpu.memory_space<vmem>>, vector<64x128xf32>
    tpu.vector_store %arg8[%c0_15, %c0_16], %15 {strides = array<i32>} : memref<64x128xf32, #tpu.memory_space<vmem>>, vector<64x128xf32>,
    return
  }
  func.func @transform_0(%arg0: i32) -> (i32, i32) {
    %c0_i32 = arith.constant 0 : i32
    %c0_i32_0 = arith.constant 0 : i32
    return %arg0, %c0_i32 : i32, i32
  }
  func.func @transform_1(%arg0: i32) -> (i32, i32) {
    %c0_i32 = arith.constant 0 : i32
    %c0_i32_0 = arith.constant 0 : i32
    return %arg0, %c0_i32 : i32, i32
  }
  func.func @transform_2(%arg0: i32) -> (i32, i32) {
    %c0_i32 = arith.constant 0 : i32
    %c0_i32_0 = arith.constant 0 : i32
    return %arg0, %c0_i32 : i32, i32
  }
  func.func @transform_3(%arg0: i32) -> (i32, i32) {
    %c0_i32 = arith.constant 0 : i32
    %c0_i32_0 = arith.constant 0 : i32
    return %arg0, %c0_i32 : i32, i32
  }
  func.func @transform_4(%arg0: i32) -> (i32, i32) {
    %c0_i32 = arith.constant 0 : i32
    %c0_i32_0 = arith.constant 0 : i32
    %c0_i32_1 = arith.constant 0 : i32
    return %c0_i32, %c0_i32_0 : i32, i32
  }
  func.func @transform_5(%arg0: i32) -> (i32, i32) {
    %c0_i32 = arith.constant 0 : i32
    %c0_i32_0 = arith.constant 0 : i32
    %c0_i32_1 = arith.constant 0 : i32
    return %c0_i32, %c0_i32_0 : i32, i32
  }
  func.func @transform_6(%arg0: i32) -> (i32, i32) {
    %c0_i32 = arith.constant 0 : i32
    %c0_i32_0 = arith.constant 0 : i32
    %c0_i32_1 = arith.constant 0 : i32
    return %c0_i32, %c0_i32_0 : i32, i32
  }
  func.func @transform_7(%arg0: i32) -> (i32, i32) {
    %c0_i32 = arith.constant 0 : i32
    %c0_i32_0 = arith.constant 0 : i32
    return %arg0, %c0_i32 : i32, i32
  }
}

</mosaic_0001>

<llo_original>
// kernel: tpu_custom_call.1
$region0: #{tpu_custom_call.1}
  #allocation0 [shape = 'u32[]', space=smem, size = 0x4, offset = 0x4, fixed_abs, tag = 'smem constant byte address 0x4 - core index']
  #allocation1 [shape = 'u32[144,128]{1,0:T(1,128)}', space=vmem, size = 0x12000, scoped, tag = 'internal scratch']
  %s0 = inlined_call_operand.hbm [shape: f32[125,128], index: 0, kind: input, shape index: {}]
  %s1 = inlined_call_operand.hbm [shape: f32[125,128], index: 1, kind: input, shape index: {}]
  %s2 = inlined_call_operand.hbm [shape: f32[125,128], index: 2, kind: input, shape index: {}]
  %s3 = inlined_call_operand.hbm [shape: f32[125,128], index: 3, kind: input, shape index: {}]
  %s4 = inlined_call_operand.hbm [shape: f32[128,128], index: 4, kind: input, shape index: {}]
  %s5 = inlined_call_operand.hbm [shape: f32[128,128], index: 5, kind: input, shape index: {}]
  %s6 = inlined_call_operand.vmem [shape: f32[8,128], index: 6, kind: input, shape index: {}]
  %s7 = inlined_call_operand.hbm [shape: f32[125,128], index: 7, kind: output, shape index: {}]
  %s8 = sld [smem:[#allocation0]]
  $region85: #{tpu_custom_call.1} parent=0
    _
  %s10 = ssub.s32 1, %s8
  %s11 = scalar_select 0, %s10, %s8
  $region1: #{tpu_custom_call.1} parent=0
    #allocation2 [shape = 'u8[65536]{0}', space=vmem, size = 0x10000, scoped, tag = 'input window, operand 0']
    #allocation3 [shape = 's32[2]{0}', space=sflag, size = 0x8, scoped, tag = 'scoped memory for tpu_custom_call.1']
    #allocation4 [shape = 's32[2]{0}', space=sflag, size = 0x8, scoped, tag = 'scoped memory for tpu_custom_call.1']
    #allocation5 [shape = 'u8[65536]{0}', space=vmem, size = 0x10000, scoped, tag = 'input window, operand 1']
    #allocation6 [shape = 's32[2]{0}', space=sflag, size = 0x8, scoped, tag = 'scoped memory for tpu_custom_call.1']
    #allocation7 [shape = 'u8[65536]{0}', space=vmem, size = 0x10000, scoped, tag = 'input window, operand 2']
    #allocation8 [shape = 'u8[65536]{0}', space=vmem, size = 0x10000, scoped, tag = 'input window, operand 3']
    #allocation9 [shape = 's32[2]{0}', space=sflag, size = 0x8, scoped, tag = 'scoped memory for tpu_custom_call.1']
    #allocation10 [shape = 'u8[65536]{0}', space=vmem, size = 0x10000, scoped, tag = 'input window, operand 4, single buffered']
    #allocation11 [shape = 'u8[65536]{0}', space=vmem, size = 0x10000, scoped, tag = 'input window, operand 5, single buffered']
    #allocation12 [shape = 's32[1]{0}', space=sflag, size = 0x4, scoped, tag = 'scoped memory for tpu_custom_call.1']
    #allocation13 [shape = 'u8[65536]{0}', space=vmem, size = 0x10000, scoped, tag = 'output window, operand 0']
    %12 = vsyncpa [#allocation3], 0
    %s13 = scalar_lea.sflag [#allocation3], 1
    %14 = vsyncpa %s13, 0
    %15 = vsyncpa [#allocation6], 0
    %s16 = scalar_lea.sflag [#allocation6], 1
    %17 = vsyncpa %s16, 0
    %18 = vsyncpa [#allocation9], 0
    %s19 = scalar_lea.sflag [#allocation9], 1
    %20 = vsyncpa %s19, 0
    %21 = vsyncpa [#allocation12], 0
    %22 = vsyncpa [#allocation4], 0
    %s23 = scalar_lea.sflag [#allocation4], 1
    %24 = vsyncpa %s23, 0
    loop: start=0, step=1, limit=4
    $region2: #{tpu_custom_call.1} parent=1 // loop_pre_header
      _
    $region3: #{tpu_custom_call.1} parent=1 // loop_header
      %s26 = sphi 0, %s30
      %p27 = scmp.ge.s32.totalorder %s26, 4
      %s36 = sphi 0, %s38
      %s39 = sphi 0, %s36
      %s40 = sphi 0, %s39
      %s56 = sphi 0, %s40
      %s62 = sphi 0, %s64
      %s65 = sphi 0, %s62
      %s66 = sphi 0, %s65
      %s82 = sphi 0, %s66
      %s88 = sphi 0, %s90
      %s91 = sphi 0, %s88
      %s92 = sphi 0, %s91
      %s108 = sphi 0, %s92
      %s114 = sphi 0, %s116
      %s117 = sphi 0, %s114
      %s118 = sphi 0, %s117
      %s134 = sphi 0, %s118
      %s138 = sphi 0, %s138
      %s140 = sphi 0, %s138
      %s141 = sphi 0, %s140
      %s155 = sphi 0, %s141
      %s159 = sphi 0, %s159
      %s161 = sphi 0, %s159
      %s162 = sphi 0, %s161
      %s176 = sphi 0, %s162
      %s180 = sphi 0, %s180
      %s182 = sphi 0, %s180
      %s183 = sphi 0, %s182
      %s197 = sphi 0, %s183
      %s203 = sphi 0, %s205
      %s206 = sphi 0, %s203
      %s207 = sphi 0, %s206
      %s223 = sphi 0, %s207
    $region4: #{tpu_custom_call.1} parent=1 // loop_header_branch
      %29 = sbr.rel (%p27) target = $region8
    $region5: #{tpu_custom_call.1} parent=1 // loop_body
      %s31 = ssub.s32 %s26, 1
      %s32 = ssub.s32 %s26, 2
      %s33 = sadd.s32 %s26, 1
      %s34 = ssub.s32 %s26, %s33
      %p35 = scmp.eq.s32.totalorder %s34, 0
      %s37 = sadd.s32 %s36, 1
      %s38 = scalar_select %p35, %s36, %s37
      %p41 = pneg %p35
      %p42 = scmp.eq.s32.totalorder %s26, 1
      %p43 = por %p41, %p42
      %p44 = scmp.ne.s32.totalorder %s36, %s39
      %p45 = scmp.eq.s32.totalorder %s26, 0
      %p46 = por %p44, %p45
      %p47 = scmp.ne.s32.totalorder %s36, %s39
      %p48 = scmp.eq.s32.totalorder %s31, 1
      %p49 = por %p47, %p48
      %p50 = scmp.ne.s32.totalorder %s39, %s40
      %p51 = scmp.eq.s32.totalorder %s31, 0
      %p52 = por %p50, %p51
      %p53 = scmp.ne.s32.totalorder %s39, %s40
      %p54 = scmp.eq.s32.totalorder %s32, 1
      %p55 = por %p53, %p54
      %p57 = scmp.ne.s32.totalorder %s40, %s56
      %p58 = scmp.eq.s32.totalorder %s32, 0
      %p59 = por %p57, %p58
      %s60 = ssub.s32 %s26, %s33
      %p61 = scmp.eq.s32.totalorder %s60, 0
      %s63 = sadd.s32 %s62, 1
      %s64 = scalar_select %p61, %s62, %s63
      %p67 = pneg %p61
      %p68 = scmp.eq.s32.totalorder %s26, 1
      %p69 = por %p67, %p68
      %p70 = scmp.ne.s32.totalorder %s62, %s65
      %p71 = scmp.eq.s32.totalorder %s26, 0
      %p72 = por %p70, %p71
      %p73 = scmp.ne.s32.totalorder %s62, %s65
      %p74 = scmp.eq.s32.totalorder %s31, 1
      %p75 = por %p73, %p74
      %p76 = scmp.ne.s32.totalorder %s65, %s66
      %p77 = scmp.eq.s32.totalorder %s31, 0
      %p78 = por %p76, %p77
      %p79 = scmp.ne.s32.totalorder %s65, %s66
      %p80 = scmp.eq.s32.totalorder %s32, 1
      %p81 = por %p79, %p80
      %p83 = scmp.ne.s32.totalorder %s66, %s82
      %p84 = scmp.eq.s32.totalorder %s32, 0
      %p85 = por %p83, %p84
      %s86 = ssub.s32 %s26, %s33
      %p87 = scmp.eq.s32.totalorder %s86, 0
      %s89 = sadd.s32 %s88, 1
      %s90 = scalar_select %p87, %s88, %s89
      %p93 = pneg %p87
      %p94 = scmp.eq.s32.totalorder %s26, 1
      %p95 = por %p93, %p94
      %p96 = scmp.ne.s32.totalorder %s88, %s91
      %p97 = scmp.eq.s32.totalorder %s26, 0
      %p98 = por %p96, %p97
      %p99 = scmp.ne.s32.totalorder %s88, %s91
      %p100 = scmp.eq.s32.totalorder %s31, 1
      %p101 = por %p99, %p100
      %p102 = scmp.ne.s32.totalorder %s91, %s92
      %p103 = scmp.eq.s32.totalorder %s31, 0
      %p104 = por %p102, %p103
      %p105 = scmp.ne.s32.totalorder %s91, %s92
      %p106 = scmp.eq.s32.totalorder %s32, 1
      %p107 = por %p105, %p106
      %p109 = scmp.ne.s32.totalorder %s92, %s108
      %p110 = scmp.eq.s32.totalorder %s32, 0
      %p111 = por %p109, %p110
      %s112 = ssub.s32 %s26, %s33
      %p113 = scmp.eq.s32.totalorder %s112, 0
      %s115 = sadd.s32 %s114, 1
      %s116 = scalar_select %p113, %s114, %s115
      %p119 = pneg %p113
      %p120 = scmp.eq.s32.totalorder %s26, 1
      %p121 = por %p119, %p120
      %p122 = scmp.ne.s32.totalorder %s114, %s117
      %p123 = scmp.eq.s32.totalorder %s26, 0
      %p124 = por %p122, %p123
      %p125 = scmp.ne.s32.totalorder %s114, %s117
      %p126 = scmp.eq.s32.totalorder %s31, 1
      %p127 = por %p125, %p126
      %p128 = scmp.ne.s32.totalorder %s117, %s118
      %p129 = scmp.eq.s32.totalorder %s31, 0
      %p130 = por %p128, %p129
      %p131 = scmp.ne.s32.totalorder %s117, %s118
      %p132 = scmp.eq.s32.totalorder %s32, 1
      %p133 = por %p131, %p132
      %p135 = scmp.ne.s32.totalorder %s118, %s134
      %p136 = scmp.eq.s32.totalorder %s32, 0
      %p137 = por %p135, %p136
      %s139 = sadd.s32 %s138, 1
      %p142 = scmp.eq.s32.totalorder %s26, 1
      %p143 = scmp.ne.s32.totalorder %s138, %s140
      %p144 = scmp.eq.s32.totalorder %s26, 0
      %p145 = por %p143, %p144
      %p146 = scmp.ne.s32.totalorder %s138, %s140
      %p147 = scmp.eq.s32.totalorder %s31, 1
      %p148 = por %p146, %p147
      %p149 = scmp.ne.s32.totalorder %s140, %s141
      %p150 = scmp.eq.s32.totalorder %s31, 0
      %p151 = por %p149, %p150
      %p152 = scmp.ne.s32.totalorder %s140, %s141
      %p153 = scmp.eq.s32.totalorder %s32, 1
      %p154 = por %p152, %p153
      %p156 = scmp.ne.s32.totalorder %s141, %s155
      %p157 = scmp.eq.s32.totalorder %s32, 0
      %p158 = por %p156, %p157
      %s160 = sadd.s32 %s159, 1
      %p163 = scmp.eq.s32.totalorder %s26, 1
      %p164 = scmp.ne.s32.totalorder %s159, %s161
      %p165 = scmp.eq.s32.totalorder %s26, 0
      %p166 = por %p164, %p165
      %p167 = scmp.ne.s32.totalorder %s159, %s161
      %p168 = scmp.eq.s32.totalorder %s31, 1
      %p169 = por %p167, %p168
      %p170 = scmp.ne.s32.totalorder %s161, %s162
      %p171 = scmp.eq.s32.totalorder %s31, 0
      %p172 = por %p170, %p171
      %p173 = scmp.ne.s32.totalorder %s161, %s162
      %p174 = scmp.eq.s32.totalorder %s32, 1
      %p175 = por %p173, %p174
      %p177 = scmp.ne.s32.totalorder %s162, %s176
      %p178 = scmp.eq.s32.totalorder %s32, 0
      %p179 = por %p177, %p178
      %s181 = sadd.s32 %s180, 1
      %p184 = scmp.eq.s32.totalorder %s26, 1
      %p185 = scmp.ne.s32.totalorder %s180, %s182
      %p186 = scmp.eq.s32.totalorder %s26, 0
      %p187 = por %p185, %p186
      %p188 = scmp.ne.s32.totalorder %s180, %s182
      %p189 = scmp.eq.s32.totalorder %s31, 1
      %p190 = por %p188, %p189
      %p191 = scmp.ne.s32.totalorder %s182, %s183
      %p192 = scmp.eq.s32.totalorder %s31, 0
      %p193 = por %p191, %p192
      %p194 = scmp.ne.s32.totalorder %s182, %s183
      %p195 = scmp.eq.s32.totalorder %s32, 1
      %p196 = por %p194, %p195
      %p198 = scmp.ne.s32.totalorder %s183, %s197
      %p199 = scmp.eq.s32.totalorder %s32, 0
      %p200 = por %p198, %p199
      %s201 = ssub.s32 %s26, %s33
      %p202 = scmp.eq.s32.totalorder %s201, 0
      %s204 = sadd.s32 %s203, 1
      %s205 = scalar_select %p202, %s203, %s204
      %p208 = pneg %p202
      %p209 = scmp.eq.s32.totalorder %s26, 1
      %p210 = por %p208, %p209
      %p211 = scmp.ne.s32.totalorder %s203, %s206
      %p212 = scmp.eq.s32.totalorder %s26, 0
      %p213 = por %p211, %p212
      %p214 = scmp.ne.s32.totalorder %s203, %s206
      %p215 = scmp.eq.s32.totalorder %s31, 1
      %p216 = por %p214, %p215
      %p217 = scmp.ne.s32.totalorder %s206, %s207
      %p218 = scmp.eq.s32.totalorder %s31, 0
      %p219 = por %p217, %p218
      %p220 = scmp.ne.s32.totalorder %s206, %s207
      %p221 = scmp.eq.s32.totalorder %s32, 1
      %p222 = por %p220, %p221
      %p224 = scmp.ne.s32.totalorder %s207, %s223
      %p225 = scmp.eq.s32.totalorder %s32, 0
      %p226 = por %p224, %p225
      %p227 = scmp.le.s32.totalorder 1, %s26
      %p228 = scmp.lt.s32.totalorder %s26, 3
      %p229 = pnand %p227, %p228
      %p230 = pneg %p229
      // Predicated region
      $region9: #{tpu_custom_call.1} parent=5 // pred_check
        _
      $region10: #{tpu_custom_call.1} parent=5 // pred_check_branch
        %232 = sbr.rel (%p229) target = $region12
      $region11: #{tpu_custom_call.1} parent=5 // pred_region
        %s233 = ssub.s32 %s26, 1
        // Predicated region
        $region13: #{tpu_custom_call.1} parent=11 // pred_check
          %p234 = pneg %p151
        $region14: #{tpu_custom_call.1} parent=11 // pred_check_branch
          %236 = sbr.rel (%p234) target = $region16
        $region15: #{tpu_custom_call.1} parent=11 // pred_region
          %s238 = ssub.s32 2048, 2048
          %239 = vsyncadd [#allocation9], %s238
          %s240 = sshll.u32 [#allocation10], 4
          %s241 = int_to_ptr.vmem [resolvable:$true] %s240
          %246 = dma.hbm_to_vmem [thread:$0]  %s4, 2048, %s241, [#allocation9], 128, 128, 8
        $region16: #{tpu_custom_call.1} parent=11 // pred_fallthru
          _
        // Predicated region
        $region17: #{tpu_custom_call.1} parent=11 // pred_check
          %p247 = pneg %p172
        $region18: #{tpu_custom_call.1} parent=11 // pred_check_branch
          %249 = sbr.rel (%p247) target = $region20
        $region19: #{tpu_custom_call.1} parent=11 // pred_region
          %s251 = ssub.s32 2048, 2048
          %252 = vsyncadd [#allocation12], %s251
          %s253 = sshll.u32 [#allocation11], 4
          %s254 = int_to_ptr.vmem [resolvable:$true] %s253
          %259 = dma.hbm_to_vmem [thread:$0]  %s5, 2048, %s254, [#allocation12], 128, 128, 8
        $region20: #{tpu_custom_call.1} parent=11 // pred_fallthru
          _
        // Predicated region
        $region21: #{tpu_custom_call.1} parent=11 // pred_check
          %p260 = pneg %p193
        $region22: #{tpu_custom_call.1} parent=11 // pred_check_branch
          %262 = sbr.rel (%p260) target = $region24
        $region23: #{tpu_custom_call.1} parent=11 // pred_region
          _
        $region24: #{tpu_custom_call.1} parent=11 // pred_fallthru
          _
      $region12: #{tpu_custom_call.1} parent=5 // pred_fallthru
        _
      %p263 = scmp.lt.s32.totalorder %s26, 2
      // Predicated region
      $region25: #{tpu_custom_call.1} parent=5 // pred_check
        %p264 = pneg %p263
      $region26: #{tpu_custom_call.1} parent=5 // pred_check_branch
        %266 = sbr.rel (%p264) target = $region28
      $region27: #{tpu_custom_call.1} parent=5 // pred_region
        // Predicated region
        $region29: #{tpu_custom_call.1} parent=27 // pred_check
          %p267 = pneg %p46
        $region30: #{tpu_custom_call.1} parent=27 // pred_check_branch
          %269 = sbr.rel (%p267) target = $region32
        $region31: #{tpu_custom_call.1} parent=27 // pred_region
          %s270 = sand.u32 %s36, 1
          %s271 = scalar_lea.sflag [#allocation3], %s270
          %s272 = sand.u32 %s36, 1
          %s273 = smul.addr %s272, 64
          %s274 = scalar_lea.vmem [#allocation2], %s273
          %s275 = smul.u32 8, %s26
          %s277 = ssub.s32 1024, 1024
          %278 = vsyncadd %s271, %s277
          %s279 = smul.addr %s275, 128
          %s280 = scalar_lea.hbm %s0, %s279
          %s281 = sshll.u32 %s274, 4
          %s282 = int_to_ptr.vmem [resolvable:$true] %s281
          %287 = dma.hbm_to_vmem [thread:$0]  %s280, 1024, %s282, %s271, 128, 128, 8
        $region32: #{tpu_custom_call.1} parent=27 // pred_fallthru
          _
        // Predicated region
        $region33: #{tpu_custom_call.1} parent=27 // pred_check
          %p288 = pneg %p72
        $region34: #{tpu_custom_call.1} parent=27 // pred_check_branch
          %290 = sbr.rel (%p288) target = $region36
        $region35: #{tpu_custom_call.1} parent=27 // pred_region
          %s291 = sand.u32 %s26, 1
          %s292 = scalar_lea.sflag [#allocation6], %s291
          %s293 = sand.u32 %s62, 1
          %s294 = smul.addr %s293, 64
          %s295 = scalar_lea.vmem [#allocation5], %s294
          %s296 = smul.u32 8, %s26
          %s298 = ssub.s32 1024, 1024
          %299 = vsyncadd %s292, %s298
          %s300 = smul.addr %s296, 128
          %s301 = scalar_lea.hbm %s1, %s300
          %s302 = sshll.u32 %s295, 4
          %s303 = int_to_ptr.vmem [resolvable:$true] %s302
          %308 = dma.hbm_to_vmem [thread:$0]  %s301, 1024, %s303, %s292, 128, 128, 8
        $region36: #{tpu_custom_call.1} parent=27 // pred_fallthru
          _
        // Predicated region
        $region37: #{tpu_custom_call.1} parent=27 // pred_check
          %p309 = pneg %p98
        $region38: #{tpu_custom_call.1} parent=27 // pred_check_branch
          %311 = sbr.rel (%p309) target = $region40
        $region39: #{tpu_custom_call.1} parent=27 // pred_region
          %s312 = sand.u32 %s26, 1
          %s313 = scalar_lea.sflag [#allocation6], %s312
          %s314 = sand.u32 %s88, 1
          %s315 = smul.addr %s314, 64
          %s316 = scalar_lea.vmem [#allocation7], %s315
          %s317 = smul.u32 8, %s26
          %s319 = ssub.s32 1024, 1024
          %320 = vsyncadd %s313, %s319
          %s321 = smul.addr %s317, 128
          %s322 = scalar_lea.hbm %s2, %s321
          %s323 = sshll.u32 %s316, 4
          %s324 = int_to_ptr.vmem [resolvable:$true] %s323
          %329 = dma.hbm_to_vmem [thread:$0]  %s322, 1024, %s324, %s313, 128, 128, 8
        $region40: #{tpu_custom_call.1} parent=27 // pred_fallthru
          _
        // Predicated region
        $region41: #{tpu_custom_call.1} parent=27 // pred_check
          %p330 = pneg %p124
        $region42: #{tpu_custom_call.1} parent=27 // pred_check_branch
          %332 = sbr.rel (%p330) target = $region44
        $region43: #{tpu_custom_call.1} parent=27 // pred_region
          %s333 = sand.u32 %s26, 1
          %s334 = scalar_lea.sflag [#allocation9], %s333
          %s335 = sand.u32 %s114, 1
          %s336 = smul.addr %s335, 64
          %s337 = scalar_lea.vmem [#allocation8], %s336
          %s338 = smul.u32 8, %s26
          %s340 = ssub.s32 1024, 1024
          %341 = vsyncadd %s334, %s340
          %s342 = smul.addr %s338, 128
          %s343 = scalar_lea.hbm %s3, %s342
          %s344 = sshll.u32 %s337, 4
          %s345 = int_to_ptr.vmem [resolvable:$true] %s344
          %350 = dma.hbm_to_vmem [thread:$0]  %s343, 1024, %s345, %s334, 128, 128, 8
        $region44: #{tpu_custom_call.1} parent=27 // pred_fallthru
          _
      $region28: #{tpu_custom_call.1} parent=5 // pred_fallthru
        _
      %p351 = scmp.le.s32.totalorder 1, %s26
      %p352 = scmp.lt.s32.totalorder %s26, 3
      %p353 = pnand %p351, %p352
      %p354 = pneg %p353
      // Predicated region
      $region45: #{tpu_custom_call.1} parent=5 // pred_check
        _
      $region46: #{tpu_custom_call.1} parent=5 // pred_check_branch
        %356 = sbr.rel (%p353) target = $region48
      $region47: #{tpu_custom_call.1} parent=5 // pred_region
        %s357 = ssub.s32 %s26, 1
        %s358 = sand.u32 %s39, 1
        %s359 = scalar_lea.sflag [#allocation3], %s358
        %s360 = sand.u32 %s39, 1
        %s361 = smul.addr %s360, 64
        %s362 = scalar_lea.vmem [#allocation2], %s361
        // Predicated region
        $region49: #{tpu_custom_call.1} parent=47 // pred_check
          %p363 = pneg %p52
        $region50: #{tpu_custom_call.1} parent=47 // pred_check_branch
          %365 = sbr.rel (%p363) target = $region52
        $region51: #{tpu_custom_call.1} parent=47 // pred_region
          %366 = dma.done %s359, 1024
        $region52: #{tpu_custom_call.1} parent=47 // pred_fallthru
          _
        %s367 = sand.u32 %s31, 1
        %s368 = scalar_lea.sflag [#allocation6], %s367
        %s369 = sand.u32 %s65, 1
        %s370 = smul.addr %s369, 64
        %s371 = scalar_lea.vmem [#allocation5], %s370
        // Predicated region
        $region53: #{tpu_custom_call.1} parent=47 // pred_check
          %p372 = pneg %p78
        $region54: #{tpu_custom_call.1} parent=47 // pred_check_branch
          %374 = sbr.rel (%p372) target = $region56
        $region55: #{tpu_custom_call.1} parent=47 // pred_region
          %375 = dma.done %s368, 1024
        $region56: #{tpu_custom_call.1} parent=47 // pred_fallthru
          _
        %s376 = sand.u32 %s31, 1
        %s377 = scalar_lea.sflag [#allocation6], %s376
        %s378 = sand.u32 %s91, 1
        %s379 = smul.addr %s378, 64
        %s380 = scalar_lea.vmem [#allocation7], %s379
        // Predicated region
        $region57: #{tpu_custom_call.1} parent=47 // pred_check
          %p381 = pneg %p104
        $region58: #{tpu_custom_call.1} parent=47 // pred_check_branch
          %383 = sbr.rel (%p381) target = $region60
        $region59: #{tpu_custom_call.1} parent=47 // pred_region
          %384 = dma.done %s377, 1024
        $region60: #{tpu_custom_call.1} parent=47 // pred_fallthru
          _
        %s385 = sand.u32 %s31, 1
        %s386 = scalar_lea.sflag [#allocation9], %s385
        %s387 = sand.u32 %s117, 1
        %s388 = smul.addr %s387, 64
        %s389 = scalar_lea.vmem [#allocation8], %s388
        // Predicated region
        $region61: #{tpu_custom_call.1} parent=47 // pred_check
          %p390 = pneg %p130
        $region62: #{tpu_custom_call.1} parent=47 // pred_check_branch
          %392 = sbr.rel (%p390) target = $region64
        $region63: #{tpu_custom_call.1} parent=47 // pred_region
          %393 = dma.done %s386, 1024
        $region64: #{tpu_custom_call.1} parent=47 // pred_fallthru
          _
        // Predicated region
        $region65: #{tpu_custom_call.1} parent=47 // pred_check
          %p394 = pneg %p151
        $region66: #{tpu_custom_call.1} parent=47 // pred_check_branch
          %396 = sbr.rel (%p394) target = $region68
        $region67: #{tpu_custom_call.1} parent=47 // pred_region
          %397 = dma.done [#allocation9], 2048
        $region68: #{tpu_custom_call.1} parent=47 // pred_fallthru
          _
        // Predicated region
        $region69: #{tpu_custom_call.1} parent=47 // pred_check
          %p398 = pneg %p172
        $region70: #{tpu_custom_call.1} parent=47 // pred_check_branch
          %400 = sbr.rel (%p398) target = $region72
        $region71: #{tpu_custom_call.1} parent=47 // pred_region
          %401 = dma.done [#allocation12], 2048
        $region72: #{tpu_custom_call.1} parent=47 // pred_fallthru
          _
        %s402 = sand.u32 %s39, 1
        %s403 = scalar_lea.sflag [#allocation3], %s402
        %s404 = sand.u32 %s39, 1
        %s405 = smul.addr %s404, 64
        %s406 = scalar_lea.vmem [#allocation2], %s405
        %p407 = pneg %p52
        %p408 = pneg %p49
        %s409 = sand.u32 %s31, 1
        %s410 = scalar_lea.sflag [#allocation6], %s409
        %s411 = sand.u32 %s65, 1
        %s412 = smul.addr %s411, 64
        %s413 = scalar_lea.vmem [#allocation5], %s412
        %p414 = pneg %p78
        %p415 = pneg %p75
        %s416 = sand.u32 %s31, 1
        %s417 = scalar_lea.sflag [#allocation6], %s416
        %s418 = sand.u32 %s91, 1
        %s419 = smul.addr %s418, 64
        %s420 = scalar_lea.vmem [#allocation7], %s419
        %p421 = pneg %p104
        %p422 = pneg %p101
        %s423 = sand.u32 %s31, 1
        %s424 = scalar_lea.sflag [#allocation9], %s423
        %s425 = sand.u32 %s117, 1
        %s426 = smul.addr %s425, 64
        %s427 = scalar_lea.vmem [#allocation8], %s426
        %p428 = pneg %p130
        %p429 = pneg %p127
        %p430 = pneg %p151
        %p431 = pneg %p148
        %p432 = pneg %p172
        %p433 = pneg %p169
        %p434 = pneg %p193
        %p435 = pneg %p190
        %p436 = pneg %p219
        %p437 = pneg %p216
        %s438 = sand.u32 %s206, 1
        %s439 = scalar_lea.sflag [#allocation4], %s438
        %s440 = sand.u32 %s206, 1
        %s441 = smul.addr %s440, 64
        %s442 = scalar_lea.vmem [#allocation13], %s441
        %s443 = smul.u32 8, %s31
        %s444 = smul.u32 8, %s31
        %s445 = smul.u32 8, %s31
        %s446 = smul.u32 8, %s31
        %s447 = smul.u32 8, %s31
        %v448 = vld [vmem:[%s362] sm:$0xff]
        %v449 = vld [vmem:[%s362 + $0x8] sm:$0xff]
        %v450 = vld [vmem:[%s362 + $0x10] sm:$0xff]
        %v451 = vld [vmem:[%s362 + $0x18] sm:$0xff]
        %v452 = vld [vmem:[%s362 + $0x20] sm:$0xff]
        %v453 = vld [vmem:[%s362 + $0x28] sm:$0xff]
        %v454 = vld [vmem:[%s362 + $0x30] sm:$0xff]
        %v455 = vld [vmem:[%s362 + $0x38] sm:$0xff]
        %v456 = vld [vmem:[%s371] sm:$0xff]
        %v457 = vld [vmem:[%s371 + $0x8] sm:$0xff]
        %v458 = vld [vmem:[%s371 + $0x10] sm:$0xff]
        %v459 = vld [vmem:[%s371 + $0x18] sm:$0xff]
        %v460 = vld [vmem:[%s371 + $0x20] sm:$0xff]
        %v461 = vld [vmem:[%s371 + $0x28] sm:$0xff]
        %v462 = vld [vmem:[%s371 + $0x30] sm:$0xff]
        %v463 = vld [vmem:[%s371 + $0x38] sm:$0xff]
        %v464 = vadd.f32 %v448, %v456
        %v465 = vadd.f32 %v449, %v457
        %v466 = vadd.f32 %v450, %v458
        %v467 = vadd.f32 %v451, %v459
        %v468 = vadd.f32 %v452, %v460
        %v469 = vadd.f32 %v453, %v461
        %v470 = vadd.f32 %v454, %v462
        %v471 = vadd.f32 %v455, %v463
        %v472 = vld [vmem:[%s380] sm:$0xff]
        %v473 = vld [vmem:[%s380 + $0x8] sm:$0xff]
        %v474 = vld [vmem:[%s380 + $0x10] sm:$0xff]
        %v475 = vld [vmem:[%s380 + $0x18] sm:$0xff]
        %v476 = vld [vmem:[%s380 + $0x20] sm:$0xff]
        %v477 = vld [vmem:[%s380 + $0x28] sm:$0xff]
        %v478 = vld [vmem:[%s380 + $0x30] sm:$0xff]
        %v479 = vld [vmem:[%s380 + $0x38] sm:$0xff]
        %v480 = vld [vmem:[%s389] sm:$0xff]
        %v481 = vld [vmem:[%s389 + $0x8] sm:$0xff]
        %v482 = vld [vmem:[%s389 + $0x10] sm:$0xff]
        %v483 = vld [vmem:[%s389 + $0x18] sm:$0xff]
        %v484 = vld [vmem:[%s389 + $0x20] sm:$0xff]
        %v485 = vld [vmem:[%s389 + $0x28] sm:$0xff]
        %v486 = vld [vmem:[%s389 + $0x30] sm:$0xff]
        %v487 = vld [vmem:[%s389 + $0x38] sm:$0xff]
        %v488 = vadd.f32 %v472, %v480
        %v489 = vadd.f32 %v473, %v481
        %v490 = vadd.f32 %v474, %v482
        %v491 = vadd.f32 %v475, %v483
        %v492 = vadd.f32 %v476, %v484
        %v493 = vadd.f32 %v477, %v485
        %v494 = vadd.f32 %v478, %v486
        %v495 = vadd.f32 %v479, %v487
        %v496 = vld [vmem:[#allocation10] sm:$0xff]
        %v497 = vld [vmem:[#allocation10 + $0x8] sm:$0xff]
        %v498 = vld [vmem:[#allocation10 + $0x10] sm:$0xff]
        %v499 = vld [vmem:[#allocation10 + $0x18] sm:$0xff]
        %v500 = vld [vmem:[#allocation10 + $0x20] sm:$0xff]
        %v501 = vld [vmem:[#allocation10 + $0x28] sm:$0xff]
        %v502 = vld [vmem:[#allocation10 + $0x30] sm:$0xff]
        %v503 = vld [vmem:[#allocation10 + $0x38] sm:$0xff]
        %v504 = vld [vmem:[#allocation10 + $0x40] sm:$0xff]
        %v505 = vld [vmem:[#allocation10 + $0x48] sm:$0xff]
        %v506 = vld [vmem:[#allocation10 + $0x50] sm:$0xff]
        %v507 = vld [vmem:[#allocation10 + $0x58] sm:$0xff]
        %v508 = vld [vmem:[#allocation10 + $0x60] sm:$0xff]
        %v509 = vld [vmem:[#allocation10 + $0x68] sm:$0xff]
        %v510 = vld [vmem:[#allocation10 + $0x70] sm:$0xff]
        %v511 = vld [vmem:[#allocation10 + $0x78] sm:$0xff]
        %v512 = vld [vmem:[#allocation11] sm:$0xff]
        %v513 = vld [vmem:[#allocation11 + $0x8] sm:$0xff]
        %v514 = vld [vmem:[#allocation11 + $0x10] sm:$0xff]
        %v515 = vld [vmem:[#allocation11 + $0x18] sm:$0xff]
        %v516 = vld [vmem:[#allocation11 + $0x20] sm:$0xff]
        %v517 = vld [vmem:[#allocation11 + $0x28] sm:$0xff]
        %v518 = vld [vmem:[#allocation11 + $0x30] sm:$0xff]
        %v519 = vld [vmem:[#allocation11 + $0x38] sm:$0xff]
        %v520 = vld [vmem:[#allocation11 + $0x40] sm:$0xff]
        %v521 = vld [vmem:[#allocation11 + $0x48] sm:$0xff]
        %v522 = vld [vmem:[#allocation11 + $0x50] sm:$0xff]
        %v523 = vld [vmem:[#allocation11 + $0x58] sm:$0xff]
        %v524 = vld [vmem:[#allocation11 + $0x60] sm:$0xff]
        %v525 = vld [vmem:[#allocation11 + $0x68] sm:$0xff]
        %v526 = vld [vmem:[#allocation11 + $0x70] sm:$0xff]
        %v527 = vld [vmem:[#allocation11 + $0x78] sm:$0xff]
        %528 = vmatprep.subr.mxu0 0.0
        %529 = vmatpush1.msra.mxu0 %v527
        %530 = vmatprep.subr.mxu0 0.0
        %531 = vmatpush1.msra.mxu0 %v526
        %532 = vmatprep.subr.mxu0 0.0
        %533 = vmatpush1.msra.mxu0 %v525
        %534 = vmatprep.subr.mxu0 0.0
        %535 = vmatpush1.msra.mxu0 %v524
        %536 = vmatprep.subr.mxu0 0.0
        %537 = vmatpush1.msra.mxu0 %v523
        %538 = vmatprep.subr.mxu0 0.0
        %539 = vmatpush1.msra.mxu0 %v522
        %540 = vmatprep.subr.mxu0 0.0
        %541 = vmatpush1.msra.mxu0 %v521
        %542 = vmatprep.subr.mxu0 0.0
        %543 = vmatpush1.msra.mxu0 %v520
        %544 = vmatprep.subr.mxu0 0.0
        %545 = vmatpush1.msra.mxu0 %v519
        %546 = vmatprep.subr.mxu0 0.0
        %547 = vmatpush1.msra.mxu0 %v518
        %548 = vmatprep.subr.mxu0 0.0
        %549 = vmatpush1.msra.mxu0 %v517
        %550 = vmatprep.subr.mxu0 0.0
        %551 = vmatpush1.msra.mxu0 %v516
        %552 = vmatprep.subr.mxu0 0.0
        %553 = vmatpush1.msra.mxu0 %v515
        %554 = vmatprep.subr.mxu0 0.0
        %555 = vmatpush1.msra.mxu0 %v514
        %556 = vmatprep.subr.mxu0 0.0
        %557 = vmatpush1.msra.mxu0 %v513
        %558 = vmatprep.subr.mxu0 0.0
        %559 = vmatpush1.msra.mxu0 %v512
        %560 = vmatprep.subr.mxu0 0.0
        %561 = vmatpush2.msra.mxu0 0.0
        %562 = vmatprep.subr.mxu0 0.0
        %563 = vmatpush2.msra.mxu0 0.0
        %564 = vmatprep.subr.mxu0 0.0
        %565 = vmatpush2.msra.mxu0 0.0
        %566 = vmatprep.subr.mxu0 0.0
        %567 = vmatpush2.msra.mxu0 0.0
        %568 = vmatprep.subr.mxu0 0.0
        %569 = vmatpush2.msra.mxu0 0.0
        %570 = vmatprep.subr.mxu0 0.0
        %571 = vmatpush2.msra.mxu0 0.0
        %572 = vmatprep.subr.mxu0 0.0
        %573 = vmatpush2.msra.mxu0 0.0
        %574 = vmatprep.subr.mxu0 0.0
        %575 = vmatpush2.msra.mxu0 0.0
        %576 = vmatprep.subr.mxu0 0.0
        %577 = vmatpush2.msra.mxu0 0.0
        %578 = vmatprep.subr.mxu0 0.0
        %579 = vmatpush2.msra.mxu0 0.0
        %580 = vmatprep.subr.mxu0 0.0
        %581 = vmatpush2.msra.mxu0 0.0
        %582 = vmatprep.subr.mxu0 0.0
        %583 = vmatpush2.msra.mxu0 0.0
        %584 = vmatprep.subr.mxu0 0.0
        %585 = vmatpush2.msra.mxu0 0.0
        %586 = vmatprep.subr.mxu0 0.0
        %587 = vmatpush2.msra.mxu0 0.0
        %588 = vmatprep.subr.mxu0 0.0
        %589 = vmatpush2.msra.mxu0 0.0
        %590 = vmatprep.subr.mxu0 0.0
        %591 = vmatpush2.msra.mxu0 0.0
        %592 = vmatprep.mubr.f32.mxu0 0.0
        %593 = vmatmul.mubr.f32.gmra.mxu0 %v488
        %v594 = vpop.f32.mrf.mxu0
        %v595 = vadd.f32 0.0, %v594
        %v596 = vpop.f32.mrf.mxu0
        %597 = vmatprep.mubr.f32.mxu0 0.0
        %598 = vmatmul.mubr.f32.gmra.mxu0 %v489
        %v599 = vpop.f32.mrf.mxu0
        %v600 = vadd.f32 0.0, %v599
        %v601 = vpop.f32.mrf.mxu0
        %602 = vmatprep.mubr.f32.mxu0 0.0
        %603 = vmatmul.mubr.f32.gmra.mxu0 %v490
        %v604 = vpop.f32.mrf.mxu0
        %v605 = vadd.f32 0.0, %v604
        %v606 = vpop.f32.mrf.mxu0
        %607 = vmatprep.mubr.f32.mxu0 0.0
        %608 = vmatmul.mubr.f32.gmra.mxu0 %v491
        %v609 = vpop.f32.mrf.mxu0
        %v610 = vadd.f32 0.0, %v609
        %v611 = vpop.f32.mrf.mxu0
        %612 = vmatprep.mubr.f32.mxu0 0.0
        %613 = vmatmul.mubr.f32.gmra.mxu0 %v492
        %v614 = vpop.f32.mrf.mxu0
        %v615 = vadd.f32 0.0, %v614
        %v616 = vpop.f32.mrf.mxu0
        %617 = vmatprep.mubr.f32.mxu0 0.0
        %618 = vmatmul.mubr.f32.gmra.mxu0 %v493
        %v619 = vpop.f32.mrf.mxu0
        %v620 = vadd.f32 0.0, %v619
        %v621 = vpop.f32.mrf.mxu0
        %622 = vmatprep.mubr.f32.mxu0 0.0
        %623 = vmatmul.mubr.f32.gmra.mxu0 %v494
        %v624 = vpop.f32.mrf.mxu0
        %v625 = vadd.f32 0.0, %v624
        %v626 = vpop.f32.mrf.mxu0
        %627 = vmatprep.mubr.f32.mxu0 0.0
        %628 = vmatmul.mubr.f32.gmra.mxu0 %v495
        %v629 = vpop.f32.mrf.mxu0
        %v630 = vadd.f32 0.0, %v629
        %v631 = vpop.f32.mrf.mxu0
        %632 = vdwg.mxu0
        %633 = vmatprep.subr.mxu0 0.0
        %634 = vmatpush1.msra.mxu0 %v511
        %635 = vmatprep.subr.mxu0 0.0
        %636 = vmatpush1.msra.mxu0 %v510
        %637 = vmatprep.subr.mxu0 0.0
        %638 = vmatpush1.msra.mxu0 %v509
        %639 = vmatprep.subr.mxu0 0.0
        %640 = vmatpush1.msra.mxu0 %v508
        %641 = vmatprep.subr.mxu0 0.0
        %642 = vmatpush1.msra.mxu0 %v507
        %643 = vmatprep.subr.mxu0 0.0
        %644 = vmatpush1.msra.mxu0 %v506
        %645 = vmatprep.subr.mxu0 0.0
        %646 = vmatpush1.msra.mxu0 %v505
        %647 = vmatprep.subr.mxu0 0.0
        %648 = vmatpush1.msra.mxu0 %v504
        %649 = vmatprep.subr.mxu0 0.0
        %650 = vmatpush1.msra.mxu0 %v503
        %651 = vmatprep.subr.mxu0 0.0
        %652 = vmatpush1.msra.mxu0 %v502
        %653 = vmatprep.subr.mxu0 0.0
        %654 = vmatpush1.msra.mxu0 %v501
        %655 = vmatprep.subr.mxu0 0.0
        %656 = vmatpush1.msra.mxu0 %v500
        %657 = vmatprep.subr.mxu0 0.0
        %658 = vmatpush1.msra.mxu0 %v499
        %659 = vmatprep.subr.mxu0 0.0
        %660 = vmatpush1.msra.mxu0 %v498
        %661 = vmatprep.subr.mxu0 0.0
        %662 = vmatpush1.msra.mxu0 %v497
        %663 = vmatprep.subr.mxu0 0.0
        %664 = vmatpush1.msra.mxu0 %v496
        %665 = vmatprep.subr.mxu0 0.0
        %666 = vmatpush2.msra.mxu0 0.0
        %667 = vmatprep.subr.mxu0 0.0
        %668 = vmatpush2.msra.mxu0 0.0
        %669 = vmatprep.subr.mxu0 0.0
        %670 = vmatpush2.msra.mxu0 0.0
        %671 = vmatprep.subr.mxu0 0.0
        %672 = vmatpush2.msra.mxu0 0.0
        %673 = vmatprep.subr.mxu0 0.0
        %674 = vmatpush2.msra.mxu0 0.0
        %675 = vmatprep.subr.mxu0 0.0
        %676 = vmatpush2.msra.mxu0 0.0
        %677 = vmatprep.subr.mxu0 0.0
        %678 = vmatpush2.msra.mxu0 0.0
        %679 = vmatprep.subr.mxu0 0.0
        %680 = vmatpush2.msra.mxu0 0.0
        %681 = vmatprep.subr.mxu0 0.0
        %682 = vmatpush2.msra.mxu0 0.0
        %683 = vmatprep.subr.mxu0 0.0
        %684 = vmatpush2.msra.mxu0 0.0
        %685 = vmatprep.subr.mxu0 0.0
        %686 = vmatpush2.msra.mxu0 0.0
        %687 = vmatprep.subr.mxu0 0.0
        %688 = vmatpush2.msra.mxu0 0.0
        %689 = vmatprep.subr.mxu0 0.0
        %690 = vmatpush2.msra.mxu0 0.0
        %691 = vmatprep.subr.mxu0 0.0
        %692 = vmatpush2.msra.mxu0 0.0
        %693 = vmatprep.subr.mxu0 0.0
        %694 = vmatpush2.msra.mxu0 0.0
        %695 = vmatprep.subr.mxu0 0.0
        %696 = vmatpush2.msra.mxu0 0.0
        %697 = vmatprep.mubr.f32.mxu0 0.0
        %698 = vmatmul.mubr.f32.gmra.mxu0 %v464
        %v699 = vpop.f32.mrf.mxu0
        %v700 = vadd.f32 %v595, %v699
        %v701 = vpop.f32.mrf.mxu0
        %702 = vmatprep.mubr.f32.mxu0 0.0
        %703 = vmatmul.mubr.f32.gmra.mxu0 %v465
        %v704 = vpop.f32.mrf.mxu0
        %v705 = vadd.f32 %v600, %v704
        %v706 = vpop.f32.mrf.mxu0
        %707 = vmatprep.mubr.f32.mxu0 0.0
        %708 = vmatmul.mubr.f32.gmra.mxu0 %v466
        %v709 = vpop.f32.mrf.mxu0
        %v710 = vadd.f32 %v605, %v709
        %v711 = vpop.f32.mrf.mxu0
        %712 = vmatprep.mubr.f32.mxu0 0.0
        %713 = vmatmul.mubr.f32.gmra.mxu0 %v467
        %v714 = vpop.f32.mrf.mxu0
        %v715 = vadd.f32 %v610, %v714
        %v716 = vpop.f32.mrf.mxu0
        %717 = vmatprep.mubr.f32.mxu0 0.0
        %718 = vmatmul.mubr.f32.gmra.mxu0 %v468
        %v719 = vpop.f32.mrf.mxu0
        %v720 = vadd.f32 %v615, %v719
        %v721 = vpop.f32.mrf.mxu0
        %722 = vmatprep.mubr.f32.mxu0 0.0
        %723 = vmatmul.mubr.f32.gmra.mxu0 %v469
        %v724 = vpop.f32.mrf.mxu0
        %v725 = vadd.f32 %v620, %v724
        %v726 = vpop.f32.mrf.mxu0
        %727 = vmatprep.mubr.f32.mxu0 0.0
        %728 = vmatmul.mubr.f32.gmra.mxu0 %v470
        %v729 = vpop.f32.mrf.mxu0
        %v730 = vadd.f32 %v625, %v729
        %v731 = vpop.f32.mrf.mxu0
        %732 = vmatprep.mubr.f32.mxu0 0.0
        %733 = vmatmul.mubr.f32.gmra.mxu0 %v471
        %v734 = vpop.f32.mrf.mxu0
        %v735 = vadd.f32 %v630, %v734
        %v736 = vpop.f32.mrf.mxu0
        %737 = vdwg.mxu0
        %v738 = vld [vmem:[%s6] sm:$0x1]
        %v739 = vlaneseq
        %v740 = vshrl.u32 %v739, 7
        %v741 = vsub.s32 0, %v740
        %v742 = vrot.slane %v738, %v741
        %v743 = vadd.f32 %v700, %v742
        %v744 = vadd.f32 %v705, %v742
        %v745 = vadd.f32 %v710, %v742
        %v746 = vadd.f32 %v715, %v742
        %v747 = vadd.f32 %v720, %v742
        %v748 = vadd.f32 %v725, %v742
        %v749 = vadd.f32 %v730, %v742
        %v750 = vadd.f32 %v735, %v742
        %v751 = vmax.f32 %v743, 0.0
        %v752 = vmax.f32 %v744, 0.0
        %v753 = vmax.f32 %v745, 0.0
        %v754 = vmax.f32 %v746, 0.0
        %v755 = vmax.f32 %v747, 0.0
        %v756 = vmax.f32 %v748, 0.0
        %v757 = vmax.f32 %v749, 0.0
        %v758 = vmax.f32 %v750, 0.0
        %759 = vst [vmem:[%s442] sm:$0xff] %v751
        %760 = vst [vmem:[%s442 + $0x8] sm:$0xff] %v752
        %761 = vst [vmem:[%s442 + $0x10] sm:$0xff] %v753
        %762 = vst [vmem:[%s442 + $0x18] sm:$0xff] %v754
        %763 = vst [vmem:[%s442 + $0x20] sm:$0xff] %v755
        %764 = vst [vmem:[%s442 + $0x28] sm:$0xff] %v756
        %765 = vst [vmem:[%s442 + $0x30] sm:$0xff] %v757
        %766 = vst [vmem:[%s442 + $0x38] sm:$0xff] %v758
        %s767 = sand.u32 %s206, 1
        %s768 = scalar_lea.sflag [#allocation4], %s767
        %s769 = sand.u32 %s206, 1
        %s770 = smul.addr %s769, 64
        %s771 = scalar_lea.vmem [#allocation13], %s770
        // Predicated region
        $region73: #{tpu_custom_call.1} parent=47 // pred_check
          %p772 = pneg %p216
        $region74: #{tpu_custom_call.1} parent=47 // pred_check_branch
          %774 = sbr.rel (%p772) target = $region76
        $region75: #{tpu_custom_call.1} parent=47 // pred_region
          %s775 = smul.u32 8, %s31
          %s777 = ssub.s32 1024, 1024
          %778 = vsyncadd %s768, %s777
          %s779 = smul.addr %s775, 128
          %s780 = scalar_lea.hbm %s7, %s779
          %s781 = sshll.u32 %s771, 4
          %s782 = int_to_ptr.vmem [resolvable:$true] %s781
          %787 = dma.vmem_to_hbm [thread:$0]  %s782, 1024, %s780, %s768, 128, 128, 8
        $region76: #{tpu_custom_call.1} parent=47 // pred_fallthru
          _
      $region48: #{tpu_custom_call.1} parent=5 // pred_fallthru
        _
      %p788 = scmp.le.s32.totalorder 2, %s26
      // Predicated region
      $region77: #{tpu_custom_call.1} parent=5 // pred_check
        %p789 = pneg %p788
      $region78: #{tpu_custom_call.1} parent=5 // pred_check_branch
        %791 = sbr.rel (%p789) target = $region80
      $region79: #{tpu_custom_call.1} parent=5 // pred_region
        %s792 = ssub.s32 %s26, 2
        // Predicated region
        $region81: #{tpu_custom_call.1} parent=79 // pred_check
          %p793 = pneg %p222
        $region82: #{tpu_custom_call.1} parent=79 // pred_check_branch
          %795 = sbr.rel (%p793) target = $region84
        $region83: #{tpu_custom_call.1} parent=79 // pred_region
          %s796 = sand.u32 %s207, 1
          %s797 = scalar_lea.sflag [#allocation4], %s796
          %s798 = sand.u32 %s207, 1
          %s799 = smul.addr %s798, 64
          %s800 = scalar_lea.vmem [#allocation13], %s799
          %801 = dma.done %s797, 1024
        $region84: #{tpu_custom_call.1} parent=79 // pred_fallthru
          _
      $region80: #{tpu_custom_call.1} parent=5 // pred_fallthru
        _
    $region6: #{tpu_custom_call.1} parent=1 // loop_footer
      %s30 = sadd.s32 1, %s26
    $region7: #{tpu_custom_call.1} parent=1 // loop_footer_branch
      %25 = sbr.rel target = $region3
    $region8: #{tpu_custom_call.1} parent=1 // loop_exit
      _
    %802 = vsyncpa [#allocation3], 1
    %s803 = scalar_lea.sflag [#allocation3], 1
    %804 = vsyncpa %s803, 1
    %805 = vsyncpa [#allocation6], 1
    %s806 = scalar_lea.sflag [#allocation6], 1
    %807 = vsyncpa %s806, 1
    %808 = vsyncpa [#allocation9], 1
    %s809 = scalar_lea.sflag [#allocation9], 1
    %810 = vsyncpa %s809, 1
    %811 = vsyncpa [#allocation12], 1
    %812 = vsyncpa [#allocation4], 1
    %s813 = scalar_lea.sflag [#allocation4], 1
    %814 = vsyncpa %s813, 1

</llo_original>
